<compile_context>
chip_gen: v7x
topology: tpu7x:2x2x1
jax: 0.10.0
libtpu: 0.0.40
codegen_flags: <defaults>
</compile_context>

<pallas_src>
import functools
import math

import jax
import jax.numpy as jnp
from jax.experimental import pallas as pl
from jax.experimental.pallas import tpu as pltpu

DEFAULT_EPS = 0.5
DEFAULT_B = 3.0

_EXP_CLAMP = 30.0  # exp(30) ~ 1e13, finite in f32; neq -> 1 limit preserved.


def _neq_kernel(x_ref, w_ref, b_ref, o_ref, *, B, eps, approx):
    # x_ref: (D, TN) f32/bf16 -- variables on sublanes, samples on lanes
    # w_ref: (D, 1)  f32      -- expression weights (lane-broadcast)
    # b_ref: (1, 1)  f32      -- expression bias, SMEM scalar
    # o_ref: (1, TN) f32      -- lane-dense neq output
    x = x_ref[...].astype(jnp.float32)      # in-kernel upcast (v5e: no bf16 VPU)
    w = w_ref[...]                          # (D, 1) f32

    # expr: VPU multiply + sublane reduction over D -> (1, TN), lane-dense.
    y = jnp.sum(x * w, axis=0, keepdims=True) + b_ref[0, 0]

    # Fused fuzzy-logic epilogue:
    #   eq  = sigmoid(B*(y+eps)) * (1 - sigmoid(B*(y-eps)))
    #       = 1 / (1 + e^{-2*B*eps} + e^{-B*(y+eps)} + e^{B*(y-eps)})
    #   neq = 1 - eq
    const = 1.0 + math.exp(-2.0 * B * eps)  # compile-time constant
    e_lo = jnp.exp(jnp.minimum(-B * (y + eps), _EXP_CLAMP))
    e_hi = jnp.exp(jnp.minimum(B * (y - eps), _EXP_CLAMP))
    denom = const + e_lo + e_hi
    eq_v = pl.reciprocal(denom, approx=approx)
    o_ref[...] = (1.0 - eq_v).astype(o_ref.dtype)


def _pick_tile_n(d, n, itemsize,
                 vmem_budget_bytes=8 * 1024 * 1024, min_grid_steps=8):
    """Pick a lane-tile width.

    Targets ~4 MiB per xs buffer (8 MiB double-buffered pair) so each grid step
    streams far more than the ~0.35 us fixed per-step overhead, while staying
    well inside every generation's scoped-VMEM budget.  Also caps the tile so
    the grid keeps >= min_grid_steps steps when N allows (v7x 2-TC sharding)."""
    per_buffer = vmem_budget_bytes // 2
    max_tn = max(128, (per_buffer // (d * itemsize)) // 128 * 128)
    # Keep several grid steps when N is large enough.
    tn_for_grid = max(128, ((pl.cdiv(n, min_grid_steps) + 127) // 128) * 128)
    tn = min(max_tn, tn_for_grid)
    # No point exceeding (rounded-up) N.
    tn = min(tn, ((n + 127) // 128) * 128)
    return int(max(128, tn))


def neq_forward_vn(xs_vn, w, b, B=DEFAULT_B, eps=DEFAULT_EPS, *,
                   tile_n=None, approx_reciprocal=True):
    """Core entry point.  xs_vn: (D, N) (variables-major, f32 or bf16),
    w: (D, 1), b: (1, 1).  Returns neq(expr(xs)) with shape (N, 1) f32."""
    D, N = xs_vn.shape
    itemsize = jnp.dtype(xs_vn.dtype).itemsize
    tn = tile_n if tile_n is not None else _pick_tile_n(D, N, itemsize)
    tn = max(128, (tn // 128) * 128)

    w = w.astype(jnp.float32).reshape(D, 1)
    b = b.astype(jnp.float32).reshape(1, 1)

    kernel = functools.partial(
        _neq_kernel, B=float(B), eps=float(eps), approx=approx_reciprocal)

    # No wrapper-side pad: Pallas handles the ragged last block.  The
    # out-of-range lanes of the edge block compute finite garbage that is
    # never written back (masked edge-block writeback), and lanes are fully
    # independent, so out[0, :N] is untouched by padding lanes.
    grid = (pl.cdiv(N, tn),)

    out = pl.pallas_call(
        kernel,
        out_shape=jax.ShapeDtypeStruct((1, N), jnp.float32),
        grid=grid,
        in_specs=[
            pl.BlockSpec((D, tn), lambda i: (0, i)),            # xs (streamed)
            pl.BlockSpec((D, 1), lambda i: (0, 0)),             # w (resident)
            pl.BlockSpec(memory_space=pltpu.MemorySpace.SMEM),  # b (scalar)
        ],
        out_specs=pl.BlockSpec((1, tn), lambda i: (0, i)),      # lane-dense
        compiler_params=pltpu.CompilerParams(
            dimension_semantics=("parallel",),
            vmem_limit_bytes=32 * 1024 * 1024),
    )(xs_vn, w, b)

    # Layout plumbing back to the public (N, 1) shape -- outside the kernel.
    return out.reshape(N, 1)


def neq_forward(xs, w, b, B=DEFAULT_B, eps=DEFAULT_EPS, *,
                tile_n=None, approx_reciprocal=True):
    """Public API (torch-style layout): xs (N, D), w (D, 1), b (1, 1) -> (N, 1).

    NOTE: the transpose below is a real XLA-side HBM round trip for (N, D)
    callers of this memory-bound kernel.  Producers that can emit (D, N)
    variables-major data (or bf16 data) should call neq_forward_vn directly."""
    return neq_forward_vn(xs.T, w, b, B, eps,
                          tile_n=tile_n, approx_reciprocal=approx_reciprocal)


def neq_reference(xs, w, b, B=DEFAULT_B, eps=DEFAULT_EPS):
    y = xs.astype(jnp.float32) @ w + b
    ge_v = jax.nn.sigmoid(B * (y + eps))
    le_v = 1.0 - jax.nn.sigmoid(B * (y - eps))
    return 1.0 - ge_v * le_v


if __name__ == "__main__":
    key = jax.random.PRNGKey(0)
    k1, k2, k3 = jax.random.split(key, 3)

    # Small but non-trivial; N deliberately NOT a multiple of 128 so the
    # ragged-edge-block path (no wrapper pad) is exercised.
    N, D = 500, 32
    xs = jax.random.normal(k1, (N, D), dtype=jnp.float32)
    w = jax.random.normal(k2, (D, 1), dtype=jnp.float32) * 0.1
    b = jax.random.normal(k3, (1, 1), dtype=jnp.float32) * 0.1

    ref = neq_reference(xs, w, b)

    # Fast path: approximate EUP reciprocal (~1e-3 relative accuracy).
    out = jax.block_until_ready(neq_forward(xs, w, b, tile_n=128))
    assert out.shape == (N, 1)
    assert jnp.allclose(out, ref, atol=5e-3, rtol=0.0)

    # Exact-divide variant matches the two-sigmoid reference tightly.
    out_exact = jax.block_until_ready(
        neq_forward(xs, w, b, tile_n=128, approx_reciprocal=False))
    assert jnp.allclose(out_exact, ref, atol=1e-5, rtol=1e-5)

    # bf16-streamed variant (halves HBM input traffic); compared against the
    # reference evaluated on the same bf16-quantized inputs.
    xs_bf16 = xs.astype(jnp.bfloat16)
    ref_bf16 = neq_reference(xs_bf16.astype(jnp.float32), w, b)
    out_bf16 = jax.block_until_ready(neq_forward(xs_bf16, w, b, tile_n=128))
    assert jnp.allclose(out_bf16, ref_bf16, atol=5e-3, rtol=0.0)

    # Auto tile sizing (raised cap + >=8-step grid heuristic) also runs clean.
    out_auto = jax.block_until_ready(neq_forward(xs, w, b))
    assert jnp.allclose(out_auto, ref, atol=5e-3, rtol=0.0)

    print("KERNEL_OK")
</pallas_src>

<mosaic_0001>
module attributes {stable_mosaic.version = 11 : i64} {
  func.func @_neq_kernel(%arg0: i32, %arg1: memref<32x128xf32, #tpu.memory_space<vmem>>, %arg2: memref<32x1xf32, #tpu.memory_space<vmem>>, %arg3: memref<1x1xf32, #tpu.memory_space<smem>>, %arg4: memref<1x128xf32, #tpu.memory_space<vmem>>) attributes {dimension_semantics = [#tpu.dimension_semantics<parallel>], iteration_bounds = array<i64: 4>, scalar_prefetch = 0 : i64, scratch_operands = 0 : i64, tpu.core_type = #tpu.core_type<tc>, window_params = [{transform_indices = @transform_0, window_bounds = array<i64: 32, 128>}, {pipeline_mode = #tpu.pipeline_mode<synchronous>, transform_indices = @transform_1, window_bounds = array<i64: 32, 1>}, {transform_indices = @transform_2, window_bounds = array<i64: 1, 1>}, {transform_indices = @transform_3, window_bounds = array<i64: 1, 128>}]} {
    %c0 = arith.constant 0 : index
    %c0_0 = arith.constant 0 : index
    %0 = vector.load %arg1[%c0, %c0_0] : memref<32x128xf32, #tpu.memory_space<vmem>>, vector<32x128xf32>
    %c0_1 = arith.constant 0 : index
    %c0_2 = arith.constant 0 : index
    %1 = vector.load %arg2[%c0_1, %c0_2] : memref<32x1xf32, #tpu.memory_space<vmem>>, vector<32x1xf32>
    %2 = vector.broadcast %1 : vector<32x1xf32> to vector<32x128xf32>
    %3 = arith.mulf %0, %2 : vector<32x128xf32>
    %cst = arith.constant dense<0.000000e+00> : vector<128xf32>
    %4 = vector.multi_reduction <add>, %3, %cst [0] : vector<32x128xf32> to vector<128xf32>
    %5 = vector.shape_cast %4 : vector<128xf32> to vector<1x128xf32>
    %c0_3 = arith.constant 0 : index
    %c0_4 = arith.constant 0 : index
    %6 = memref.load %arg3[%c0_3, %c0_4] : memref<1x1xf32, #tpu.memory_space<smem>>
    %7 = vector.broadcast %6 : f32 to vector<1x128xf32>
    %8 = arith.addf %5, %7 : vector<1x128xf32>
    %cst_5 = arith.constant 5.000000e-01 : f32
    %9 = vector.broadcast %cst_5 : f32 to vector<1x128xf32>
    %10 = arith.addf %8, %9 : vector<1x128xf32>
    %cst_6 = arith.constant -3.000000e+00 : f32
    %11 = vector.broadcast %cst_6 : f32 to vector<1x128xf32>
    %12 = arith.mulf %11, %10 : vector<1x128xf32>
    %cst_7 = arith.constant 3.000000e+01 : f32
    %13 = vector.broadcast %cst_7 : f32 to vector<1x128xf32>
    %14 = arith.minimumf %12, %13 : vector<1x128xf32>
    %15 = math.exp %14 : vector<1x128xf32>
    %cst_8 = arith.constant 5.000000e-01 : f32
    %16 = vector.broadcast %cst_8 : f32 to vector<1x128xf32>
    %17 = arith.subf %8, %16 : vector<1x128xf32>
    %cst_9 = arith.constant 3.000000e+00 : f32
    %18 = vector.broadcast %cst_9 : f32 to vector<1x128xf32>
    %19 = arith.mulf %18, %17 : vector<1x128xf32>
    %cst_10 = arith.constant 3.000000e+01 : f32
    %20 = vector.broadcast %cst_10 : f32 to vector<1x128xf32>
    %21 = arith.minimumf %19, %20 : vector<1x128xf32>
    %22 = math.exp %21 : vector<1x128xf32>
    %cst_11 = arith.constant 1.04978704 : f32
    %23 = vector.broadcast %cst_11 : f32 to vector<1x128xf32>
    %24 = arith.addf %23, %15 : vector<1x128xf32>
    %25 = arith.addf %24, %22 : vector<1x128xf32>
    %26 = tpu.reciprocal %25 {approx = true} : vector<1x128xf32> -> vector<1x128xf32>
    %cst_12 = arith.constant 1.000000e+00 : f32
    %27 = vector.broadcast %cst_12 : f32 to vector<1x128xf32>
    %28 = arith.subf %27, %26 : vector<1x128xf32>
    %c0_13 = arith.constant 0 : index
    %c0_14 = arith.constant 0 : index
    %29 = vector.load %arg4[%c0_13, %c0_14] : memref<1x128xf32, #tpu.memory_space<vmem>>, vector<1x128xf32>
    tpu.vector_store %arg4[%c0_13, %c0_14], %28 {strides = array<i32>} : memref<1x128xf32, #tpu.memory_space<vmem>>, vector<1x128xf32>,
    return
  }
  func.func @transform_0(%arg0: i32) -> (i32, i32) {
    %c0_i32 = arith.constant 0 : i32
    %c0_i32_0 = arith.constant 0 : i32
    return %c0_i32, %arg0 : i32, i32
  }
  func.func @transform_1(%arg0: i32) -> (i32, i32) {
    %c0_i32 = arith.constant 0 : i32
    %c0_i32_0 = arith.constant 0 : i32
    %c0_i32_1 = arith.constant 0 : i32
    return %c0_i32, %c0_i32_0 : i32, i32
  }
  func.func @transform_2(%arg0: i32) -> (i32, i32) {
    %c0_i32 = arith.constant 0 : i32
    %c0_i32_0 = arith.constant 0 : i32
    %c0_i32_1 = arith.constant 0 : i32
    return %c0_i32, %c0_i32_0 : i32, i32
  }
  func.func @transform_3(%arg0: i32) -> (i32, i32) {
    %c0_i32 = arith.constant 0 : i32
    %c0_i32_0 = arith.constant 0 : i32
    return %c0_i32, %arg0 : i32, i32
  }
}

</mosaic_0001>

<llo_original>
// kernel: tpu_custom_call.1
$region0: #{tpu_custom_call.1}
  #allocation0 [shape = 'u32[]', space=smem, size = 0x4, offset = 0x4, fixed_abs, tag = 'smem constant byte address 0x4 - core index']
  #allocation1 [shape = 'u32[144,128]{1,0:T(1,128)}', space=vmem, size = 0x12000, scoped, tag = 'internal scratch']
  #allocation2 [shape = 'f32[1,1]{1,0:T(1,128)S(6)}', space=smem, size = 0x200, scoped, tag = 'scoped memory for tpu_custom_call.1']
  %s0 = inlined_call_operand.hbm [shape: f32[32,500], index: 0, kind: input, shape index: {}]
  %s1 = inlined_call_operand.vmem [shape: f32[32,1], index: 1, kind: input, shape index: {}]
  %s2 = inlined_call_operand.<no memory space> [shape: f32[1,1], index: 2, kind: input, shape index: {}]
  %s3 = inlined_call_operand.hbm [shape: f32[1,500], index: 3, kind: output, shape index: {}]
  %s4 = sld [smem:[#allocation0]]
  $region49: #{tpu_custom_call.1} parent=0
    _
  %s6 = ssub.s32 1, %s4
  %s7 = scalar_select 0, %s6, %s4
  %8 = sst [smem:[#allocation2]] %s2
  $region1: #{tpu_custom_call.1} parent=0
    #allocation3 [shape = 'u8[32768]{0}', space=vmem, size = 0x8000, scoped, tag = 'input window, operand 0']
    #allocation4 [shape = 's32[2]{0}', space=sflag, size = 0x8, scoped, tag = 'scoped memory for tpu_custom_call.1']
    #allocation5 [shape = 's32[2]{0}', space=sflag, size = 0x8, scoped, tag = 'scoped memory for tpu_custom_call.1']
    #allocation6 [shape = 'u8[1024]{0}', space=vmem, size = 0x400, scoped, tag = 'output window, operand 0']
    %9 = vsyncpa [#allocation4], 0
    %s10 = scalar_lea.sflag [#allocation4], 1
    %11 = vsyncpa %s10, 0
    %12 = vsyncpa [#allocation5], 0
    %s13 = scalar_lea.sflag [#allocation5], 1
    %14 = vsyncpa %s13, 0
    loop: start=0, step=1, limit=6
    $region2: #{tpu_custom_call.1} parent=1 // loop_pre_header
      _
    $region3: #{tpu_custom_call.1} parent=1 // loop_header
      %s16 = sphi 0, %s20
      %p17 = scmp.ge.s32.totalorder %s16, 6
      %s26 = sphi 0, %s28
      %s29 = sphi 0, %s26
      %s30 = sphi 0, %s29
      %s46 = sphi 0, %s30
      %s50 = sphi 0, %s50
      %s52 = sphi 0, %s50
      %s53 = sphi 0, %s52
      %s67 = sphi 0, %s53
      %s71 = sphi 0, %s71
      %s73 = sphi 0, %s71
      %s74 = sphi 0, %s73
      %s88 = sphi 0, %s74
      %s94 = sphi 0, %s96
      %s97 = sphi 0, %s94
      %s98 = sphi 0, %s97
      %s114 = sphi 0, %s98
    $region4: #{tpu_custom_call.1} parent=1 // loop_header_branch
      %19 = sbr.rel (%p17) target = $region8
    $region5: #{tpu_custom_call.1} parent=1 // loop_body
      %s21 = ssub.s32 %s16, 1
      %s22 = ssub.s32 %s16, 2
      %s23 = sadd.s32 %s16, 1
      %s24 = ssub.s32 %s16, %s23
      %p25 = scmp.eq.s32.totalorder %s24, 0
      %s27 = sadd.s32 %s26, 1
      %s28 = scalar_select %p25, %s26, %s27
      %p31 = pneg %p25
      %p32 = scmp.eq.s32.totalorder %s16, 3
      %p33 = por %p31, %p32
      %p34 = scmp.ne.s32.totalorder %s26, %s29
      %p35 = scmp.eq.s32.totalorder %s16, 0
      %p36 = por %p34, %p35
      %p37 = scmp.ne.s32.totalorder %s26, %s29
      %p38 = scmp.eq.s32.totalorder %s21, 3
      %p39 = por %p37, %p38
      %p40 = scmp.ne.s32.totalorder %s29, %s30
      %p41 = scmp.eq.s32.totalorder %s21, 0
      %p42 = por %p40, %p41
      %p43 = scmp.ne.s32.totalorder %s29, %s30
      %p44 = scmp.eq.s32.totalorder %s22, 3
      %p45 = por %p43, %p44
      %p47 = scmp.ne.s32.totalorder %s30, %s46
      %p48 = scmp.eq.s32.totalorder %s22, 0
      %p49 = por %p47, %p48
      %s51 = sadd.s32 %s50, 1
      %p54 = scmp.eq.s32.totalorder %s16, 3
      %p55 = scmp.ne.s32.totalorder %s50, %s52
      %p56 = scmp.eq.s32.totalorder %s16, 0
      %p57 = por %p55, %p56
      %p58 = scmp.ne.s32.totalorder %s50, %s52
      %p59 = scmp.eq.s32.totalorder %s21, 3
      %p60 = por %p58, %p59
      %p61 = scmp.ne.s32.totalorder %s52, %s53
      %p62 = scmp.eq.s32.totalorder %s21, 0
      %p63 = por %p61, %p62
      %p64 = scmp.ne.s32.totalorder %s52, %s53
      %p65 = scmp.eq.s32.totalorder %s22, 3
      %p66 = por %p64, %p65
      %p68 = scmp.ne.s32.totalorder %s53, %s67
      %p69 = scmp.eq.s32.totalorder %s22, 0
      %p70 = por %p68, %p69
      %s72 = sadd.s32 %s71, 1
      %p75 = scmp.eq.s32.totalorder %s16, 3
      %p76 = scmp.ne.s32.totalorder %s71, %s73
      %p77 = scmp.eq.s32.totalorder %s16, 0
      %p78 = por %p76, %p77
      %p79 = scmp.ne.s32.totalorder %s71, %s73
      %p80 = scmp.eq.s32.totalorder %s21, 3
      %p81 = por %p79, %p80
      %p82 = scmp.ne.s32.totalorder %s73, %s74
      %p83 = scmp.eq.s32.totalorder %s21, 0
      %p84 = por %p82, %p83
      %p85 = scmp.ne.s32.totalorder %s73, %s74
      %p86 = scmp.eq.s32.totalorder %s22, 3
      %p87 = por %p85, %p86
      %p89 = scmp.ne.s32.totalorder %s74, %s88
      %p90 = scmp.eq.s32.totalorder %s22, 0
      %p91 = por %p89, %p90
      %s92 = ssub.s32 %s16, %s23
      %p93 = scmp.eq.s32.totalorder %s92, 0
      %s95 = sadd.s32 %s94, 1
      %s96 = scalar_select %p93, %s94, %s95
      %p99 = pneg %p93
      %p100 = scmp.eq.s32.totalorder %s16, 3
      %p101 = por %p99, %p100
      %p102 = scmp.ne.s32.totalorder %s94, %s97
      %p103 = scmp.eq.s32.totalorder %s16, 0
      %p104 = por %p102, %p103
      %p105 = scmp.ne.s32.totalorder %s94, %s97
      %p106 = scmp.eq.s32.totalorder %s21, 3
      %p107 = por %p105, %p106
      %p108 = scmp.ne.s32.totalorder %s97, %s98
      %p109 = scmp.eq.s32.totalorder %s21, 0
      %p110 = por %p108, %p109
      %p111 = scmp.ne.s32.totalorder %s97, %s98
      %p112 = scmp.eq.s32.totalorder %s22, 3
      %p113 = por %p111, %p112
      %p115 = scmp.ne.s32.totalorder %s98, %s114
      %p116 = scmp.eq.s32.totalorder %s22, 0
      %p117 = por %p115, %p116
      %p118 = scmp.le.s32.totalorder 1, %s16
      %p119 = scmp.lt.s32.totalorder %s16, 5
      %p120 = pnand %p118, %p119
      %p121 = pneg %p120
      // Predicated region
      $region9: #{tpu_custom_call.1} parent=5 // pred_check
        _
      $region10: #{tpu_custom_call.1} parent=5 // pred_check_branch
        %123 = sbr.rel (%p120) target = $region12
      $region11: #{tpu_custom_call.1} parent=5 // pred_region
        %s124 = ssub.s32 %s16, 1
        // Predicated region
        $region13: #{tpu_custom_call.1} parent=11 // pred_check
          %p125 = pneg %p63
        $region14: #{tpu_custom_call.1} parent=11 // pred_check_branch
          %127 = sbr.rel (%p125) target = $region16
        $region15: #{tpu_custom_call.1} parent=11 // pred_region
          _
        $region16: #{tpu_custom_call.1} parent=11 // pred_fallthru
          _
        // Predicated region
        $region17: #{tpu_custom_call.1} parent=11 // pred_check
          %p128 = pneg %p84
        $region18: #{tpu_custom_call.1} parent=11 // pred_check_branch
          %130 = sbr.rel (%p128) target = $region20
        $region19: #{tpu_custom_call.1} parent=11 // pred_region
          _
        $region20: #{tpu_custom_call.1} parent=11 // pred_fallthru
          _
      $region12: #{tpu_custom_call.1} parent=5 // pred_fallthru
        _
      %p131 = scmp.lt.s32.totalorder %s16, 4
      // Predicated region
      $region21: #{tpu_custom_call.1} parent=5 // pred_check
        %p132 = pneg %p131
      $region22: #{tpu_custom_call.1} parent=5 // pred_check_branch
        %134 = sbr.rel (%p132) target = $region24
      $region23: #{tpu_custom_call.1} parent=5 // pred_region
        // Predicated region
        $region25: #{tpu_custom_call.1} parent=23 // pred_check
          %p135 = pneg %p36
        $region26: #{tpu_custom_call.1} parent=23 // pred_check_branch
          %137 = sbr.rel (%p135) target = $region28
        $region27: #{tpu_custom_call.1} parent=23 // pred_region
          %s138 = sand.u32 %s26, 1
          %s139 = scalar_lea.sflag [#allocation4], %s138
          %s140 = sand.u32 %s26, 1
          %s141 = smul.addr %s140, 32
          %s142 = scalar_lea.vmem [#allocation3], %s141
          %s144 = ssub.s32 512, 512
          %145 = vsyncadd %s139, %s144
          %s146 = smul.addr %s16, 128
          %s147 = scalar_lea.hbm %s0, %s146
          %s148 = sshll.u32 %s142, 4
          %s149 = int_to_ptr.vmem [resolvable:$true] %s148
          %154 = dma.hbm_to_vmem [thread:$0]  %s147, 512, %s149, %s139, 512, 128, 8
        $region28: #{tpu_custom_call.1} parent=23 // pred_fallthru
          _
      $region24: #{tpu_custom_call.1} parent=5 // pred_fallthru
        _
      %p155 = scmp.le.s32.totalorder 1, %s16
      %p156 = scmp.lt.s32.totalorder %s16, 5
      %p157 = pnand %p155, %p156
      %p158 = pneg %p157
      // Predicated region
      $region29: #{tpu_custom_call.1} parent=5 // pred_check
        _
      $region30: #{tpu_custom_call.1} parent=5 // pred_check_branch
        %160 = sbr.rel (%p157) target = $region32
      $region31: #{tpu_custom_call.1} parent=5 // pred_region
        %s161 = ssub.s32 %s16, 1
        %s162 = sand.u32 %s29, 1
        %s163 = scalar_lea.sflag [#allocation4], %s162
        %s164 = sand.u32 %s29, 1
        %s165 = smul.addr %s164, 32
        %s166 = scalar_lea.vmem [#allocation3], %s165
        // Predicated region
        $region33: #{tpu_custom_call.1} parent=31 // pred_check
          %p167 = pneg %p42
        $region34: #{tpu_custom_call.1} parent=31 // pred_check_branch
          %169 = sbr.rel (%p167) target = $region36
        $region35: #{tpu_custom_call.1} parent=31 // pred_region
          %170 = dma.done %s163, 512
        $region36: #{tpu_custom_call.1} parent=31 // pred_fallthru
          _
        %s171 = sand.u32 %s29, 1
        %s172 = scalar_lea.sflag [#allocation4], %s171
        %s173 = sand.u32 %s29, 1
        %s174 = smul.addr %s173, 32
        %s175 = scalar_lea.vmem [#allocation3], %s174
        %p176 = pneg %p42
        %p177 = pneg %p39
        %p178 = pneg %p63
        %p179 = pneg %p60
        %p180 = pneg %p84
        %p181 = pneg %p81
        %p182 = pneg %p110
        %p183 = pneg %p107
        %s184 = sand.u32 %s97, 1
        %s185 = scalar_lea.sflag [#allocation5], %s184
        %s186 = sand.u32 %s97, 1
        %s187 = scalar_lea.vmem [#allocation6], %s186
        %v188 = vld [vmem:[%s166] sm:$0xff]
        %v189 = vld [vmem:[%s166 + $0x8] sm:$0xff]
        %v190 = vld [vmem:[%s166 + $0x10] sm:$0xff]
        %v191 = vld [vmem:[%s166 + $0x18] sm:$0xff]
        %v192 = vld [vmem:[%s1] sm:$0xff]
        %v193 = vld [vmem:[%s1 + $0x8] sm:$0xff]
        %v194 = vld [vmem:[%s1 + $0x10] sm:$0xff]
        %v195 = vld [vmem:[%s1 + $0x18] sm:$0xff]
        %197 = vset.pattern.permute.xlu0 0
        %198 = vperm.xlu0 %197, %v192
        %v199 = vpop.permute.xlu0 %198
        %202 = vset.pattern.permute.xlu0 0
        %203 = vperm.xlu0 %202, %v193
        %v204 = vpop.permute.xlu0 %203
        %207 = vset.pattern.permute.xlu0 0
        %208 = vperm.xlu0 %207, %v194
        %v209 = vpop.permute.xlu0 %208
        %212 = vset.pattern.permute.xlu0 0
        %213 = vperm.xlu0 %212, %v195
        %v214 = vpop.permute.xlu0 %213
        %v216 = vmul.f32 %v188, %v199
        %v217 = vmul.f32 %v189, %v204
        %v218 = vmul.f32 %v190, %v209
        %v219 = vmul.f32 %v191, %v214
        %v220 = vadd.f32 %v216, %v217
        %v221 = vadd.f32 %v220, %v218
        %v222 = vadd.f32 %v221, %v219
        %v223 = vrot.slane %v222, 4
        %v224 = vadd.f32 %v222, %v223
        %v225 = vrot.slane %v224, 2
        %v226 = vadd.f32 %v224, %v225
        %v227 = vrot.slane %v226, 1
        %v228 = vadd.f32 %v226, %v227
        %s229 = sld [smem:[#allocation2]]
        %v230 = vstv %s229
        %v231 = vadd.f32 %v228, %v230
        %v232 = vadd.f32 %v231, 0.5
        %v233 = vmul.f32 %v232, -3.0
        %v234 = vmin.f32 %v233, 30.0
        %v235 = vmul.f32 %v234, 1.442695
        %v236 = vpow.pop %v235
        %v237 = vsub.f32 %v231, 0.5
        %v238 = vmul.f32 %v237, 3.0
        %v239 = vmin.f32 %v238, 30.0
        %v240 = vmul.f32 %v239, 1.442695
        %v241 = vpow.pop %v240
        %v242 = vadd.f32 %v236, 1.049787
        %v243 = vadd.f32 %v242, %v241
        %v244 = vrcp.pop %v243
        %v245 = vsub.f32 1.0, %v244
        %246 = vst [vmem:[%s187] sm:$0x1] %v245
        %s247 = sand.u32 %s97, 1
        %s248 = scalar_lea.sflag [#allocation5], %s247
        %s249 = sand.u32 %s97, 1
        %s250 = scalar_lea.vmem [#allocation6], %s249
        // Predicated region
        $region37: #{tpu_custom_call.1} parent=31 // pred_check
          %p251 = pneg %p107
        $region38: #{tpu_custom_call.1} parent=31 // pred_check_branch
          %253 = sbr.rel (%p251) target = $region40
        $region39: #{tpu_custom_call.1} parent=31 // pred_region
          %s255 = ssub.s32 16, 16
          %256 = vsyncadd %s248, %s255
          %s257 = smul.addr %s21, 16
          %s258 = scalar_lea.hbm %s3, %s257
          %s260 = sshll.u32 %s250, 4
          %s261 = int_to_ptr.vmem [resolvable:$true] %s260
          %263 = dma.vmem_to_hbm [thread:$0]  %s261, 16, %s258, %s248
        $region40: #{tpu_custom_call.1} parent=31 // pred_fallthru
          _
      $region32: #{tpu_custom_call.1} parent=5 // pred_fallthru
        _
      %p264 = scmp.le.s32.totalorder 2, %s16
      // Predicated region
      $region41: #{tpu_custom_call.1} parent=5 // pred_check
        %p265 = pneg %p264
      $region42: #{tpu_custom_call.1} parent=5 // pred_check_branch
        %267 = sbr.rel (%p265) target = $region44
      $region43: #{tpu_custom_call.1} parent=5 // pred_region
        %s268 = ssub.s32 %s16, 2
        // Predicated region
        $region45: #{tpu_custom_call.1} parent=43 // pred_check
          %p269 = pneg %p113
        $region46: #{tpu_custom_call.1} parent=43 // pred_check_branch
          %271 = sbr.rel (%p269) target = $region48
        $region47: #{tpu_custom_call.1} parent=43 // pred_region
          %s272 = sand.u32 %s98, 1
          %s273 = scalar_lea.sflag [#allocation5], %s272
          %s274 = sand.u32 %s98, 1
          %s275 = scalar_lea.vmem [#allocation6], %s274
          %276 = dma.done %s273, 16
        $region48: #{tpu_custom_call.1} parent=43 // pred_fallthru
          _
      $region44: #{tpu_custom_call.1} parent=5 // pred_fallthru
        _
    $region6: #{tpu_custom_call.1} parent=1 // loop_footer
      %s20 = sadd.s32 1, %s16
    $region7: #{tpu_custom_call.1} parent=1 // loop_footer_branch
      %15 = sbr.rel target = $region3
    $region8: #{tpu_custom_call.1} parent=1 // loop_exit
      _
    %277 = vsyncpa [#allocation4], 1
    %s278 = scalar_lea.sflag [#allocation4], 1
    %279 = vsyncpa %s278, 1
    %280 = vsyncpa [#allocation5], 1
    %s281 = scalar_lea.sflag [#allocation5], 1
    %282 = vsyncpa %s281, 1

</llo_original>
